<compile_context>
chip_gen: v7x
topology: tpu7x:2x2x1
jax: 0.10.0
libtpu: 0.0.40
codegen_flags: <defaults>
</compile_context>

<pallas_src>
import jax
import jax.numpy as jnp
from jax.experimental import pallas as pl
from jax.experimental.pallas import tpu as pltpu


def _round_up(x, m):
    return (x + m - 1) // m * m


def _vmem_budget_bytes():
    """Generation-aware usable-VMEM budget (leave headroom for compiler scratch)."""
    phys = 128 << 20
    try:
        info = pltpu.get_tpu_info()
        phys = int(getattr(info, "vmem_capacity_bytes", phys))
    except Exception:
        pass
    # ~96 MiB on 128 MiB parts (v5e/v6e), ~48 MiB on 64 MiB parts (v7x).
    return int(min(phys * 3 // 4, 100 << 20))


def prepare_value_head_params(w1, b1, w2, b2, compute_dtype=jnp.bfloat16,
                              max_w1_block_cols=None):
    """One-time parameter prep: cast, transpose to [in, out], pad, pick W1 tiling.

    w1: [H, H] (PyTorch [out, in]), b1: [H], w2: [1, H], b2: [1].
    """
    H = int(w1.shape[0])
    H_pad = _round_up(H, 128)
    itemsize = jnp.dtype(compute_dtype).itemsize
    budget = _vmem_budget_bytes()

    # Reserve VMEM for the double-buffered x tile (tm <= 512) + small stuff;
    # the remainder can hold (double-buffered) W1 blocks.
    w1_budget = max(budget - 2 * 512 * H_pad * itemsize - (4 << 20), 8 << 20)

    if 2 * H_pad * H_pad * itemsize <= w1_budget:
        tn = H_pad                      # W1 fully VMEM-resident: fetched once.
    else:
        tn = 128
        for cand in (2048, 1024, 512, 256):
            if 2 * H_pad * cand * itemsize <= w1_budget:
                tn = cand
                break
    if max_w1_block_cols is not None:   # (testing hook: force the streamed path)
        tn = min(tn, max(128, (int(max_w1_block_cols) // 128) * 128))
    Hout_pad = _round_up(H_pad, tn)

    # W1 pre-transposed ONCE to canonical [K=in, N=out] MXU layout, padded, cast.
    w1_t = jnp.pad(w1.astype(compute_dtype).T,
                   ((0, H_pad - H), (0, Hout_pad - H)))
    # b1 / w2 packed into one lane-dense (2, Hout_pad) f32 input.
    b1_p = jnp.pad(b1.astype(jnp.float32).reshape(-1), (0, Hout_pad - H))
    w2_p = jnp.pad(w2.astype(jnp.float32).reshape(-1), (0, Hout_pad - H))
    bw = jnp.stack([b1_p, w2_p], axis=0)
    b2_s = b2.astype(jnp.float32).reshape(1)

    return dict(hidden_size=H, H_pad=H_pad, Hout_pad=Hout_pad, tn=tn,
                compute_dtype=compute_dtype, vmem_budget=budget,
                w1_t=w1_t, bw=bw, b2=b2_s)


def _value_head_kernel(x_ref, w1_ref, bw_ref, b2_ref, out_ref, acc_ref):
    # x_ref:  [tm, H_pad]  (compute dtype; resident across j)
    # w1_ref: [H_pad, tn]  (compute dtype; canonical [K, N] slice of W1^T)
    # bw_ref: [2, tn] f32  (row 0 = b1 slice, row 1 = w2 slice)
    # b2_ref: SMEM (1,) f32
    # acc_ref: [tm, 1] f32 per-row value accumulator, out_ref: [tm, 1] f32
    j = pl.program_id(1)

    @pl.when(j == 0)
    def _():
        acc_ref[...] = jnp.zeros_like(acc_ref)

    # Layer 1 partial: full-K MXU dot against this out-dim slice (f32 accumulate).
    h = jnp.dot(x_ref[...], w1_ref[...], preferred_element_type=jnp.float32)
    # Bias + ReLU (dropout = identity, eval mode).
    h = jnp.maximum(h + bw_ref[0:1, :], 0.0)
    # Layer 2 partial (H -> 1): VPU multiply + lane reduce, tiny per-row RMW.
    acc_ref[...] += jnp.sum(h * bw_ref[1:2, :], axis=-1, keepdims=True)

    @pl.when(j == pl.num_programs(1) - 1)
    def _():
        out_ref[...] = (acc_ref[...] + b2_ref[0]).astype(out_ref.dtype)


def value_head_forward(hidden_states, params):
    """hidden_states: [..., H]. Returns float32 [..., 1]."""
    orig_shape = hidden_states.shape
    H = params["hidden_size"]
    assert orig_shape[-1] == H
    x2d = hidden_states.reshape(-1, H)
    M = x2d.shape[0]

    H_pad = params["H_pad"]
    Hout_pad = params["Hout_pad"]
    tn = params["tn"]
    cdt = params["compute_dtype"]
    itemsize = jnp.dtype(cdt).itemsize
    budget = params["vmem_budget"]

    # M tile: large enough to amortize any W1 streaming, small enough for VMEM.
    tm = min(512, _round_up(max(M, 1), 8))

    def vmem_need(tm_):
        return (2 * (tm_ * H_pad + H_pad * tn) * itemsize   # x / W1 blocks, dbl-buffered
                + 2 * 2 * tn * 4                            # packed b1/w2 blocks
                + 2 * tm_ * 4 + tm_ * 4                     # out blocks + acc scratch
                + (2 << 20))                                 # headroom

    while tm > 8 and vmem_need(tm) > budget:
        tm = max(8, (tm // 2 // 8) * 8)
    M_pad = _round_up(M, tm)

    x_p = jnp.pad(x2d.astype(cdt), ((0, M_pad - M), (0, H_pad - H)))
    grid = (M_pad // tm, Hout_pad // tn)

    # W1 is read once if resident (tn == Hout_pad), else once per M tile.
    n_w1_reads = 1 if tn == Hout_pad else grid[0]
    cost = pl.CostEstimate(
        flops=int(2 * M * H * H + 4 * M * H),
        transcendentals=0,
        bytes_accessed=int(M_pad * H_pad * itemsize
                           + n_w1_reads * H_pad * Hout_pad * itemsize
                           + 2 * Hout_pad * 4 + M_pad * 4),
    )
    vmem_limit = int(min(max(vmem_need(tm), 32 << 20), budget))

    out = pl.pallas_call(
        _value_head_kernel,
        out_shape=jax.ShapeDtypeStruct((M_pad, 1), jnp.float32),
        grid=grid,
        in_specs=[
            pl.BlockSpec((tm, H_pad), lambda i, j: (i, 0)),       # x tile, resident per i
            pl.BlockSpec((H_pad, tn), lambda i, j: (0, j)),       # W1^T [K, N] slice
            pl.BlockSpec((2, tn), lambda i, j: (0, j)),           # packed b1/w2 slice
            pl.BlockSpec(memory_space=pltpu.MemorySpace.SMEM),    # b2 scalar
        ],
        out_specs=pl.BlockSpec((tm, 1), lambda i, j: (i, 0)),
        scratch_shapes=[pltpu.VMEM((tm, 1), jnp.float32)],
        compiler_params=pltpu.CompilerParams(
            dimension_semantics=("parallel", "arbitrary"),
            vmem_limit_bytes=vmem_limit,
        ),
        cost_estimate=cost,
    )(x_p, params["w1_t"], params["bw"], params["b2"])

    return out[:M].reshape(*orig_shape[:-1], 1)


def init_value_head_params(key, hidden_size):
    """Deterministic PyTorch-style uniform(-1/sqrt(fan_in), 1/sqrt(fan_in)) init."""
    k1, k2, k3, k4 = jax.random.split(key, 4)
    bound1 = 1.0 / jnp.sqrt(hidden_size)
    w1 = jax.random.uniform(k1, (hidden_size, hidden_size), jnp.float32, -bound1, bound1)
    b1 = jax.random.uniform(k2, (hidden_size,), jnp.float32, -bound1, bound1)
    w2 = jax.random.uniform(k3, (1, hidden_size), jnp.float32, -bound1, bound1)
    b2 = jax.random.uniform(k4, (1,), jnp.float32, -bound1, bound1)
    return w1, b1, w2, b2


if __name__ == "__main__":
    batch, seq, hidden = 2, 8, 32
    key = jax.random.PRNGKey(0)
    k_x, k_p = jax.random.split(key)

    # Stand-in for base_model(...).last_hidden_state (the causal LM is external).
    hidden_states = jax.random.normal(k_x, (batch, seq, hidden), jnp.float32)
    last_hidden_state = hidden_states[:, -1, :]           # [:, -1, :] as in the module

    w1, b1, w2, b2 = init_value_head_params(k_p, hidden)

    def ref_forward(x, dtype):
        h = jnp.dot(x.astype(dtype), w1.T.astype(dtype),
                    preferred_element_type=jnp.float32) + b1
        h = jnp.maximum(h, 0.0)
        return jnp.dot(h, w2.T.astype(jnp.float32)) + b2

    # --- strict f32 path (matches fp32 PyTorch semantics within 1e-5) ---
    params_f32 = prepare_value_head_params(w1, b1, w2, b2, compute_dtype=jnp.float32)
    value = jax.block_until_ready(value_head_forward(last_hidden_state, params_f32))
    assert value.shape == (batch, 1)
    assert jnp.allclose(value, ref_forward(last_hidden_state, jnp.float32),
                        atol=1e-5, rtol=1e-5)

    value_all = jax.block_until_ready(value_head_forward(hidden_states, params_f32))
    assert value_all.shape == (batch, seq, 1)
    assert jnp.allclose(value_all, ref_forward(hidden_states, jnp.float32),
                        atol=1e-5, rtol=1e-5)

    # --- fast bf16-weight path (f32 MXU accumulation), recommended for large H ---
    params_bf16 = prepare_value_head_params(w1, b1, w2, b2, compute_dtype=jnp.bfloat16)
    value_bf16 = jax.block_until_ready(value_head_forward(last_hidden_state, params_bf16))
    assert value_bf16.shape == (batch, 1)
    assert jnp.allclose(value_bf16, ref_forward(last_hidden_state, jnp.bfloat16),
                        atol=1e-4, rtol=1e-4)
    assert jnp.allclose(value_bf16, ref_forward(last_hidden_state, jnp.float32),
                        atol=5e-2, rtol=5e-2)

    # --- exercise the streamed-W1 (multi out-dim block) accumulation path ---
    hidden2 = 256
    k_x2, k_p2 = jax.random.split(jax.random.PRNGKey(1))
    x2 = jax.random.normal(k_x2, (batch, hidden2), jnp.float32)
    w1b, b1b, w2b, b2b = init_value_head_params(k_p2, hidden2)
    params_stream = prepare_value_head_params(w1b, b1b, w2b, b2b,
                                              compute_dtype=jnp.float32,
                                              max_w1_block_cols=128)
    v2 = jax.block_until_ready(value_head_forward(x2, params_stream))
    ref2 = jnp.maximum(x2 @ w1b.T + b1b, 0.0) @ w2b.T + b2b
    assert v2.shape == (batch, 1)
    assert jnp.allclose(v2, ref2, atol=1e-5, rtol=1e-5)

    print("KERNEL_OK")
</pallas_src>

<mosaic_0001>
module attributes {stable_mosaic.version = 11 : i64} {
  func.func @_value_head_kernel(%arg0: i32, %arg1: i32, %arg2: memref<8x128xf32, #tpu.memory_space<vmem>>, %arg3: memref<128x128xf32, #tpu.memory_space<vmem>>, %arg4: memref<2x128xf32, #tpu.memory_space<vmem>>, %arg5: memref<1xf32, #tpu.memory_space<smem>>, %arg6: memref<8x1xf32, #tpu.memory_space<vmem>>, %arg7: memref<8x1xf32, #tpu.memory_space<vmem>>) attributes {dimension_semantics = [#tpu.dimension_semantics<parallel>, #tpu.dimension_semantics<arbitrary>], iteration_bounds = array<i64: 1, 1>, scalar_prefetch = 0 : i64, scratch_operands = 1 : i64, tpu.core_type = #tpu.core_type<tc>, window_params = [{transform_indices = @transform_0, window_bounds = array<i64: 8, 128>}, {transform_indices = @transform_1, window_bounds = array<i64: 128, 128>}, {transform_indices = @transform_2, window_bounds = array<i64: 2, 128>}, {transform_indices = @transform_3, window_bounds = array<i64: 1>}, {transform_indices = @transform_4, window_bounds = array<i64: 8, 1>}]} {
    %c0_i32 = arith.constant 0 : i32
    %0 = arith.cmpi eq, %arg1, %c0_i32 : i32
    %1 = arith.extui %0 : i1 to i32
    %c0_i32_0 = arith.constant 0 : i32
    %2 = arith.cmpi ne, %1, %c0_i32_0 : i32
    scf.if %2 {
      %cst_15 = arith.constant 0.000000e+00 : f32
      %22 = vector.broadcast %cst_15 : f32 to vector<8x1xf32>
      %c0_16 = arith.constant 0 : index
      %c0_17 = arith.constant 0 : index
      %23 = vector.load %arg7[%c0_16, %c0_17] : memref<8x1xf32, #tpu.memory_space<vmem>>, vector<8x1xf32>
      tpu.vector_store %arg7[%c0_16, %c0_17], %22 {strides = array<i32>} : memref<8x1xf32, #tpu.memory_space<vmem>>, vector<8x1xf32>,
    } else {
    }
    %c0 = arith.constant 0 : index
    %c0_1 = arith.constant 0 : index
    %3 = vector.load %arg2[%c0, %c0_1] : memref<8x128xf32, #tpu.memory_space<vmem>>, vector<8x128xf32>
    %c0_2 = arith.constant 0 : index
    %c0_3 = arith.constant 0 : index
    %4 = vector.load %arg3[%c0_2, %c0_3] : memref<128x128xf32, #tpu.memory_space<vmem>>, vector<128x128xf32>
    %cst = arith.constant dense<0.000000e+00> : vector<8x128xf32>
    %5 = tpu.matmul %3, %4, %cst {dimension_numbers = #tpu.dot_dimension_numbers<[1], [0], [0], [1], [0, 0, 1, 1], [], []>} : vector<8x128xf32>, vector<128x128xf32>, vector<8x128xf32> -> vector<8x128xf32>
    %c0_4 = arith.constant 0 : index
    %c0_5 = arith.constant 0 : index
    %6 = vector.load %arg4[%c0_4, %c0_5] : memref<2x128xf32, #tpu.memory_space<vmem>>, vector<1x128xf32>
    %7 = vector.broadcast %6 : vector<1x128xf32> to vector<8x128xf32>
    %8 = arith.addf %5, %7 : vector<8x128xf32>
    %cst_6 = arith.constant 0.000000e+00 : f32
    %9 = vector.broadcast %cst_6 : f32 to vector<8x128xf32>
    %10 = arith.maximumf %8, %9 : vector<8x128xf32>
    %c0_7 = arith.constant 0 : index
    %c0_8 = arith.constant 0 : index
    %11 = vector.load %arg7[%c0_7, %c0_8] : memref<8x1xf32, #tpu.memory_space<vmem>>, vector<8x1xf32>
    %c1 = arith.constant 1 : index
    %c0_9 = arith.constant 0 : index
    %12 = vector.load %arg4[%c1, %c0_9] : memref<2x128xf32, #tpu.memory_space<vmem>>, vector<1x128xf32>
    %13 = vector.broadcast %12 : vector<1x128xf32> to vector<8x128xf32>
    %14 = arith.mulf %10, %13 : vector<8x128xf32>
    %cst_10 = arith.constant dense<0.000000e+00> : vector<8xf32>
    %15 = vector.multi_reduction <add>, %14, %cst_10 [1] : vector<8x128xf32> to vector<8xf32>
    %16 = vector.shape_cast %15 : vector<8xf32> to vector<8x1xf32>
    %17 = arith.addf %11, %16 : vector<8x1xf32>
    %c0_11 = arith.constant 0 : index
    %c0_12 = arith.constant 0 : index
    %18 = vector.load %arg7[%c0_11, %c0_12] : memref<8x1xf32, #tpu.memory_space<vmem>>, vector<8x1xf32>
    tpu.vector_store %arg7[%c0_11, %c0_12], %17 {strides = array<i32>} : memref<8x1xf32, #tpu.memory_space<vmem>>, vector<8x1xf32>,
    %c0_i32_13 = arith.constant 0 : i32
    %19 = arith.cmpi eq, %arg1, %c0_i32_13 : i32
    %20 = arith.extui %19 : i1 to i32
    %c0_i32_14 = arith.constant 0 : i32
    %21 = arith.cmpi ne, %20, %c0_i32_14 : i32
    scf.if %21 {
      %c0_15 = arith.constant 0 : index
      %c0_16 = arith.constant 0 : index
      %22 = vector.load %arg7[%c0_15, %c0_16] : memref<8x1xf32, #tpu.memory_space<vmem>>, vector<8x1xf32>
      %c0_17 = arith.constant 0 : index
      %23 = memref.load %arg5[%c0_17] : memref<1xf32, #tpu.memory_space<smem>>
      %24 = vector.broadcast %23 : f32 to vector<8x1xf32>
      %25 = arith.addf %22, %24 : vector<8x1xf32>
      %c0_18 = arith.constant 0 : index
      %c0_19 = arith.constant 0 : index
      %26 = vector.load %arg6[%c0_18, %c0_19] : memref<8x1xf32, #tpu.memory_space<vmem>>, vector<8x1xf32>
      tpu.vector_store %arg6[%c0_18, %c0_19], %25 {strides = array<i32>} : memref<8x1xf32, #tpu.memory_space<vmem>>, vector<8x1xf32>,
    } else {
    }
    return
  }
  func.func @transform_0(%arg0: i32, %arg1: i32) -> (i32, i32) {
    %c0_i32 = arith.constant 0 : i32
    %c0_i32_0 = arith.constant 0 : i32
    return %arg0, %c0_i32 : i32, i32
  }
  func.func @transform_1(%arg0: i32, %arg1: i32) -> (i32, i32) {
    %c0_i32 = arith.constant 0 : i32
    %c0_i32_0 = arith.constant 0 : i32
    return %c0_i32, %arg1 : i32, i32
  }
  func.func @transform_2(%arg0: i32, %arg1: i32) -> (i32, i32) {
    %c0_i32 = arith.constant 0 : i32
    %c0_i32_0 = arith.constant 0 : i32
    return %c0_i32, %arg1 : i32, i32
  }
  func.func @transform_3(%arg0: i32, %arg1: i32) -> i32 {
    %c0_i32 = arith.constant 0 : i32
    %c0_i32_0 = arith.constant 0 : i32
    return %c0_i32 : i32
  }
  func.func @transform_4(%arg0: i32, %arg1: i32) -> (i32, i32) {
    %c0_i32 = arith.constant 0 : i32
    %c0_i32_0 = arith.constant 0 : i32
    return %arg0, %c0_i32 : i32, i32
  }
}

</mosaic_0001>

<llo_original>
// kernel: tpu_custom_call.1
$region0: #{tpu_custom_call.1}
  #allocation0 [shape = 'u32[]', space=smem, size = 0x4, offset = 0x4, fixed_abs, tag = 'smem constant byte address 0x4 - core index']
  #allocation1 [shape = 'u32[144,128]{1,0:T(1,128)}', space=vmem, size = 0x12000, scoped, tag = 'internal scratch']
  #allocation2 [shape = 'f32[8,1]{1,0:T(8,128)}', space=vmem, size = 0x1000, scoped, tag = 'scratch operand']
  #allocation3 [shape = 'f32[1]{0:T(128)S(6)}', space=smem, size = 0x200, scoped, tag = 'scoped memory for tpu_custom_call.1']
  %s0 = inlined_call_operand.hbm [shape: f32[8,128], index: 0, kind: input, shape index: {}]
  %s1 = inlined_call_operand.hbm [shape: f32[128,128], index: 1, kind: input, shape index: {}]
  %s2 = inlined_call_operand.vmem [shape: f32[2,128], index: 2, kind: input, shape index: {}]
  %s3 = inlined_call_operand.<no memory space> [shape: f32[1], index: 3, kind: input, shape index: {}]
  %s4 = inlined_call_operand.vmem [shape: f32[8,1], index: 4, kind: output, shape index: {}]
  %s5 = sld [smem:[#allocation0]]
  $region42: #{tpu_custom_call.1} parent=0
    _
  %s7 = ssub.s32 1, %s5
  %s8 = scalar_select 0, %s7, %s5
  %9 = sst [smem:[#allocation3]] %s3
  $region1: #{tpu_custom_call.1} parent=0
    #allocation4 [shape = 'u8[4096]{0}', space=vmem, size = 0x1000, scoped, tag = 'input window, operand 0, single buffered']
    #allocation5 [shape = 's32[1]{0}', space=sflag, size = 0x4, scoped, tag = 'scoped memory for tpu_custom_call.1']
    #allocation6 [shape = 'u8[65536]{0}', space=vmem, size = 0x10000, scoped, tag = 'input window, operand 1, single buffered']
    #allocation7 [shape = 's32[1]{0}', space=sflag, size = 0x4, scoped, tag = 'scoped memory for tpu_custom_call.1']
    %10 = vsyncpa [#allocation5], 0
    %11 = vsyncpa [#allocation7], 0
    // Predicated region
    $region2: #{tpu_custom_call.1} parent=1 // pred_check
      _
    $region3: #{tpu_custom_call.1} parent=1 // pred_check_branch
      %13 = sbr.rel (0) target = $region5
    $region4: #{tpu_custom_call.1} parent=1 // pred_region
      %s15 = ssub.s32 128, 128
      %16 = vsyncadd [#allocation5], %s15
      %s18 = sshll.u32 [#allocation4], 4
      %s19 = int_to_ptr.vmem [resolvable:$true] %s18
      %21 = dma.hbm_to_vmem [thread:$0]  %s0, 128, %s19, [#allocation5]
    $region5: #{tpu_custom_call.1} parent=1 // pred_fallthru
      _
    // Predicated region
    $region6: #{tpu_custom_call.1} parent=1 // pred_check
      _
    $region7: #{tpu_custom_call.1} parent=1 // pred_check_branch
      %23 = sbr.rel (0) target = $region9
    $region8: #{tpu_custom_call.1} parent=1 // pred_region
      %s25 = ssub.s32 2048, 2048
      %26 = vsyncadd [#allocation7], %s25
      %s27 = sshll.u32 [#allocation6], 4
      %s28 = int_to_ptr.vmem [resolvable:$true] %s27
      %33 = dma.hbm_to_vmem [thread:$0]  %s1, 2048, %s28, [#allocation7], 128, 128, 8
    $region9: #{tpu_custom_call.1} parent=1 // pred_fallthru
      _
    // Predicated region
    $region10: #{tpu_custom_call.1} parent=1 // pred_check
      _
    $region11: #{tpu_custom_call.1} parent=1 // pred_check_branch
      %35 = sbr.rel (0) target = $region13
    $region12: #{tpu_custom_call.1} parent=1 // pred_region
      _
    $region13: #{tpu_custom_call.1} parent=1 // pred_fallthru
      _
    // Predicated region
    $region14: #{tpu_custom_call.1} parent=1 // pred_check
      _
    $region15: #{tpu_custom_call.1} parent=1 // pred_check_branch
      %37 = sbr.rel (0) target = $region17
    $region16: #{tpu_custom_call.1} parent=1 // pred_region
      _
    $region17: #{tpu_custom_call.1} parent=1 // pred_fallthru
      _
    // Predicated region
    $region18: #{tpu_custom_call.1} parent=1 // pred_check
      _
    $region19: #{tpu_custom_call.1} parent=1 // pred_check_branch
      %39 = sbr.rel (0) target = $region21
    $region20: #{tpu_custom_call.1} parent=1 // pred_region
      %40 = dma.done [#allocation5], 128
    $region21: #{tpu_custom_call.1} parent=1 // pred_fallthru
      _
    // Predicated region
    $region22: #{tpu_custom_call.1} parent=1 // pred_check
      _
    $region23: #{tpu_custom_call.1} parent=1 // pred_check_branch
      %42 = sbr.rel (0) target = $region25
    $region24: #{tpu_custom_call.1} parent=1 // pred_region
      %43 = dma.done [#allocation7], 2048
    $region25: #{tpu_custom_call.1} parent=1 // pred_fallthru
      _
    %p44 = scmp.eq.s32.totalorder 0, 0
    // Predicated region
    $region26: #{tpu_custom_call.1} parent=1 // pred_check
      %p45 = pneg %p44
    $region27: #{tpu_custom_call.1} parent=1 // pred_check_branch
      %47 = sbr.rel (%p45) target = $region29
    $region28: #{tpu_custom_call.1} parent=1 // pred_region
      %vm48 = vcmask 7168
      %49 = vst.msk [vmem:[#allocation2] sm:$0xff] %vm48, 0.0
    $region29: #{tpu_custom_call.1} parent=1 // pred_fallthru
      _
    %v50 = vld [vmem:[#allocation4] sm:$0xff]
    %v51 = vld [vmem:[#allocation6] sm:$0xff]
    %v52 = vld [vmem:[#allocation6 + $0x8] sm:$0xff]
    %v53 = vld [vmem:[#allocation6 + $0x10] sm:$0xff]
    %v54 = vld [vmem:[#allocation6 + $0x18] sm:$0xff]
    %v55 = vld [vmem:[#allocation6 + $0x20] sm:$0xff]
    %v56 = vld [vmem:[#allocation6 + $0x28] sm:$0xff]
    %v57 = vld [vmem:[#allocation6 + $0x30] sm:$0xff]
    %v58 = vld [vmem:[#allocation6 + $0x38] sm:$0xff]
    %v59 = vld [vmem:[#allocation6 + $0x40] sm:$0xff]
    %v60 = vld [vmem:[#allocation6 + $0x48] sm:$0xff]
    %v61 = vld [vmem:[#allocation6 + $0x50] sm:$0xff]
    %v62 = vld [vmem:[#allocation6 + $0x58] sm:$0xff]
    %v63 = vld [vmem:[#allocation6 + $0x60] sm:$0xff]
    %v64 = vld [vmem:[#allocation6 + $0x68] sm:$0xff]
    %v65 = vld [vmem:[#allocation6 + $0x70] sm:$0xff]
    %v66 = vld [vmem:[#allocation6 + $0x78] sm:$0xff]
    %v67 = vld [vmem:[%s2] sm:$0x1]
    %v68 = vlaneseq
    %v69 = vshrl.u32 %v68, 7
    %v70 = vsub.s32 0, %v69
    %v71 = vrot.slane %v67, %v70
    %72 = vmatprep.subr.mxu0 0.0
    %73 = vmatpush1.msra.mxu0 %v51
    %74 = vmatprep.subr.mxu0 0.0
    %75 = vmatpush1.msra.mxu0 %v52
    %76 = vmatprep.subr.mxu0 0.0
    %77 = vmatpush1.msra.mxu0 %v53
    %78 = vmatprep.subr.mxu0 0.0
    %79 = vmatpush1.msra.mxu0 %v54
    %80 = vmatprep.subr.mxu0 0.0
    %81 = vmatpush1.msra.mxu0 %v55
    %82 = vmatprep.subr.mxu0 0.0
    %83 = vmatpush1.msra.mxu0 %v56
    %84 = vmatprep.subr.mxu0 0.0
    %85 = vmatpush1.msra.mxu0 %v57
    %86 = vmatprep.subr.mxu0 0.0
    %87 = vmatpush1.msra.mxu0 %v58
    %88 = vmatprep.subr.mxu0 0.0
    %89 = vmatpush1.msra.mxu0 %v59
    %90 = vmatprep.subr.mxu0 0.0
    %91 = vmatpush1.msra.mxu0 %v60
    %92 = vmatprep.subr.mxu0 0.0
    %93 = vmatpush1.msra.mxu0 %v61
    %94 = vmatprep.subr.mxu0 0.0
    %95 = vmatpush1.msra.mxu0 %v62
    %96 = vmatprep.subr.mxu0 0.0
    %97 = vmatpush1.msra.mxu0 %v63
    %98 = vmatprep.subr.mxu0 0.0
    %99 = vmatpush1.msra.mxu0 %v64
    %100 = vmatprep.subr.mxu0 0.0
    %101 = vmatpush1.msra.mxu0 %v65
    %102 = vmatprep.subr.mxu0 0.0
    %103 = vmatpush1.msra.mxu0 %v66
    %104 = vmatprep.subr.mxu0 0.0
    %105 = vmatpush1.msra.mxu0 0.0
    %106 = vmatprep.subr.mxu0 0.0
    %107 = vmatpush1.msra.mxu0 0.0
    %108 = vmatprep.subr.mxu0 0.0
    %109 = vmatpush1.msra.mxu0 0.0
    %110 = vmatprep.subr.mxu0 0.0
    %111 = vmatpush1.msra.mxu0 0.0
    %112 = vmatprep.subr.mxu0 0.0
    %113 = vmatpush1.msra.mxu0 0.0
    %114 = vmatprep.subr.mxu0 0.0
    %115 = vmatpush1.msra.mxu0 0.0
    %116 = vmatprep.subr.mxu0 0.0
    %117 = vmatpush1.msra.mxu0 0.0
    %118 = vmatprep.subr.mxu0 0.0
    %119 = vmatpush1.msra.mxu0 0.0
    %120 = vmatprep.subr.mxu0 0.0
    %121 = vmatpush1.msra.mxu0 0.0
    %122 = vmatprep.subr.mxu0 0.0
    %123 = vmatpush1.msra.mxu0 0.0
    %124 = vmatprep.subr.mxu0 0.0
    %125 = vmatpush1.msra.mxu0 0.0
    %126 = vmatprep.subr.mxu0 0.0
    %127 = vmatpush1.msra.mxu0 0.0
    %128 = vmatprep.subr.mxu0 0.0
    %129 = vmatpush1.msra.mxu0 0.0
    %130 = vmatprep.subr.mxu0 0.0
    %131 = vmatpush1.msra.mxu0 0.0
    %132 = vmatprep.subr.mxu0 0.0
    %133 = vmatpush1.msra.mxu0 0.0
    %134 = vmatprep.subr.mxu0 0.0
    %135 = vmatpush1.msra.mxu0 0.0
    %136 = vmatprep.mubr.f32.mxu0 0.0
    %137 = vmatmul.mubr.f32.gmra.mrb[0].mxu0 %v50
    %v138 = vpop.f32.mrb[0].mxu0
    %v139 = vadd.f32 %v71, %v138
    %v140 = vpop.f32.mrb[0].mxu0
    %141 = vdwg.mxu0
    %v142 = vmax.f32 %v139, 0.0
    %v143 = vld [vmem:[#allocation2] sm:$0xff]
    %v144 = vld [vmem:[%s2 + $0x1] sm:$0x1]
    %v145 = vlaneseq
    %v146 = vshrl.u32 %v145, 7
    %v147 = vsub.s32 0, %v146
    %v148 = vrot.slane %v144, %v147
    %v149 = vmul.f32 %v142, %v148
    %150 = vadd.xlane.f32.xlu0 %v149
    %v151 = vpop.xlane.xlu0 %150
    %v152 = vadd.f32 %v143, %v151
    %vm153 = vcmask 7168
    %154 = vst.msk [vmem:[#allocation2] sm:$0xff] %vm153, %v152
    // Predicated region
    $region30: #{tpu_custom_call.1} parent=1 // pred_check
      %p155 = pneg %p44
    $region31: #{tpu_custom_call.1} parent=1 // pred_check_branch
      %157 = sbr.rel (%p155) target = $region33
    $region32: #{tpu_custom_call.1} parent=1 // pred_region
      %v158 = vld [vmem:[#allocation2] sm:$0xff]
      %s159 = sld [smem:[#allocation3]]
      %v160 = vstv %s159
      %v161 = vadd.f32 %v158, %v160
      %162 = vst.msk [vmem:[%s4] sm:$0xff] %vm153, %v161
    $region33: #{tpu_custom_call.1} parent=1 // pred_fallthru
      _
    // Predicated region
    $region34: #{tpu_custom_call.1} parent=1 // pred_check
      _
    $region35: #{tpu_custom_call.1} parent=1 // pred_check_branch
      %164 = sbr.rel (0) target = $region37
    $region36: #{tpu_custom_call.1} parent=1 // pred_region
      _
    $region37: #{tpu_custom_call.1} parent=1 // pred_fallthru
      _
    // Predicated region
    $region38: #{tpu_custom_call.1} parent=1 // pred_check
      _
    $region39: #{tpu_custom_call.1} parent=1 // pred_check_branch
      %166 = sbr.rel (0) target = $region41
    $region40: #{tpu_custom_call.1} parent=1 // pred_region
      _
    $region41: #{tpu_custom_call.1} parent=1 // pred_fallthru
      _
    %167 = vsyncpa [#allocation5], 1
    %168 = vsyncpa [#allocation7], 1

</llo_original>
